<compile_context>
chip_gen: v6e
topology: v6e:2x2x1
jax: 0.10.0
libtpu: 0.0.40
codegen_flags: <defaults>
</compile_context>

<pallas_src>
import jax
import jax.numpy as jnp
from jax.experimental import pallas as pl
from jax.experimental.pallas import tpu as pltpu


def _pae_kernel(x_ref, w_ref, b_ref, o_ref):
    # x_ref: (tm, F)   tokens x features
    # w_ref: (n_bin, F)  PyTorch Linear weight layout (kept as-is)
    # b_ref: (n_bin, 1)
    # o_ref: (n_bin, tm) transposed output block (token axis on lanes)
    acc = jax.lax.dot_general(
        w_ref[...], x_ref[...],
        dimension_numbers=(((1,), (1,)), ((), ())),   # contract the F axes
        preferred_element_type=jnp.float32,
    )                                                  # (n_bin, tm) f32
    o_ref[...] = (acc + b_ref[...]).astype(o_ref.dtype)


def _pick_tile(n_tokens, batch, tm_max):
    """Token-tile size: as large as possible (memory-bound), multiple of 128
    when actually tiling, and >=2 total grid steps when we can afford it."""
    if n_tokens <= tm_max:
        if batch >= 2 or n_tokens < 256:
            return n_tokens                      # whole per-batch slab
        # batch == 1: split tokens so both v7x TensorCores get work
        half = -(-n_tokens // 2)
        return ((half + 127) // 128) * 128       # round up to lane multiple
    return tm_max


def pae_forward(x, weight, bias, *, tm_max=4096):
    """x: (B, L, L, n_feat); weight: (n_bin, n_feat) [PyTorch layout]; bias: (n_bin,).
    Returns (B, n_bin, L, L) == permute(0,3,1,2) of Linear(x)."""
    B, L1, L2, F = x.shape
    n_bin = weight.shape[0]
    n_tok = L1 * L2

    x_flat = x.reshape(B, n_tok, F)      # contiguous -> free reshape
    b_col = bias.reshape(n_bin, 1)

    tm = _pick_tile(n_tok, B, tm_max)
    n_tiles = pl.cdiv(n_tok, tm)

    out = pl.pallas_call(
        _pae_kernel,
        out_shape=jax.ShapeDtypeStruct((B, n_bin, n_tok), x.dtype),
        grid=(B, n_tiles),
        in_specs=[
            # streamed input: one (tm, F) token slab per step
            pl.BlockSpec((None, tm, F), lambda b, i: (b, i, 0)),
            # weight / bias: constant index map -> VMEM-resident across the grid
            pl.BlockSpec((n_bin, F), lambda b, i: (0, 0)),
            pl.BlockSpec((n_bin, 1), lambda b, i: (0, 0)),
        ],
        # lane-dense transposed output block (n_bin, tm)
        out_specs=pl.BlockSpec((None, n_bin, tm), lambda b, i: (b, 0, i)),
        compiler_params=pltpu.CompilerParams(
            dimension_semantics=("parallel", "parallel"),
        ),
    )(x_flat, weight, b_col)

    # (B, n_bin, L*L) -> (B, n_bin, L, L): contiguous reshape, no transpose pass.
    return out.reshape(B, n_bin, L1, L2)


if __name__ == "__main__":
    # Small shapes consistent with the module: pair features x -> (B, L, L, n_feat)
    B, L, n_feat, n_bin_pae = 2, 8, 32, 64

    key = jax.random.PRNGKey(0)
    kx, kw, kb = jax.random.split(key, 3)

    x = jax.random.normal(kx, (B, L, L, n_feat), dtype=jnp.float32)

    # NOTE: the PyTorch module zero-inits proj.weight / proj.bias, which would
    # make the output identically zero. Use deterministic random parameters so
    # the matmul path is exercised; forward semantics (Linear + permute) are
    # identical.
    weight = 0.02 * jax.random.normal(kw, (n_bin_pae, n_feat), dtype=jnp.float32)
    bias = 0.01 * jax.random.normal(kb, (n_bin_pae,), dtype=jnp.float32)

    out = pae_forward(x, weight, bias)
    out = jax.block_until_ready(out)

    # Reference (plain JAX) check of the PyTorch semantics.
    ref = jnp.einsum("blkf,of->blko", x, weight) + bias
    ref = jnp.transpose(ref, (0, 3, 1, 2))

    assert out.shape == (B, n_bin_pae, L, L), out.shape
    assert jnp.allclose(out, ref, atol=1e-5, rtol=1e-5)

    print("KERNEL_OK")
</pallas_src>

<mosaic_0001>
module attributes {stable_mosaic.version = 11 : i64} {
  func.func @_pae_kernel(%arg0: i32, %arg1: i32, %arg2: memref<1x64x32xf32, #tpu.memory_space<vmem>>, %arg3: memref<64x32xf32, #tpu.memory_space<vmem>>, %arg4: memref<64x1xf32, #tpu.memory_space<vmem>>, %arg5: memref<1x64x64xf32, #tpu.memory_space<vmem>>) attributes {dimension_semantics = [#tpu.dimension_semantics<parallel>, #tpu.dimension_semantics<parallel>], iteration_bounds = array<i64: 2, 1>, scalar_prefetch = 0 : i64, scratch_operands = 0 : i64, tpu.core_type = #tpu.core_type<tc>, window_params = [{transform_indices = @transform_0, window_bounds = array<i64: 1, 64, 32>}, {pipeline_mode = #tpu.pipeline_mode<synchronous>, transform_indices = @transform_1, window_bounds = array<i64: 64, 32>}, {pipeline_mode = #tpu.pipeline_mode<synchronous>, transform_indices = @transform_2, window_bounds = array<i64: 64, 1>}, {transform_indices = @transform_3, window_bounds = array<i64: 1, 64, 64>}]} {
    %c0 = arith.constant 0 : index
    %c0_0 = arith.constant 0 : index
    %0 = vector.load %arg3[%c0, %c0_0] : memref<64x32xf32, #tpu.memory_space<vmem>>, vector<64x32xf32>
    %c0_1 = arith.constant 0 : index
    %c0_2 = arith.constant 0 : index
    %c0_3 = arith.constant 0 : index
    %1 = vector.load %arg2[%c0_1, %c0_2, %c0_3] : memref<1x64x32xf32, #tpu.memory_space<vmem>>, vector<1x64x32xf32>
    %2 = vector.shape_cast %1 : vector<1x64x32xf32> to vector<64x32xf32>
    %cst = arith.constant dense<0.000000e+00> : vector<64x64xf32>
    %3 = tpu.matmul %0, %2, %cst {dimension_numbers = #tpu.dot_dimension_numbers<[1], [1], [0], [0], [0, 0, 1, 0], [], []>} : vector<64x32xf32>, vector<64x32xf32>, vector<64x64xf32> -> vector<64x64xf32>
    %c0_4 = arith.constant 0 : index
    %c0_5 = arith.constant 0 : index
    %4 = vector.load %arg4[%c0_4, %c0_5] : memref<64x1xf32, #tpu.memory_space<vmem>>, vector<64x1xf32>
    %5 = vector.broadcast %4 : vector<64x1xf32> to vector<64x64xf32>
    %6 = arith.addf %3, %5 : vector<64x64xf32>
    %c0_6 = arith.constant 0 : index
    %c0_7 = arith.constant 0 : index
    %c0_8 = arith.constant 0 : index
    %7 = vector.load %arg5[%c0_6, %c0_7, %c0_8] : memref<1x64x64xf32, #tpu.memory_space<vmem>>, vector<1x64x64xf32>
    %8 = vector.shape_cast %7 : vector<1x64x64xf32> to vector<64x64xf32>
    %9 = vector.shape_cast %6 : vector<64x64xf32> to vector<1x64x64xf32>
    tpu.vector_store %arg5[%c0_6, %c0_7, %c0_8], %9 {strides = array<i32>} : memref<1x64x64xf32, #tpu.memory_space<vmem>>, vector<1x64x64xf32>,
    return
  }
  func.func @transform_0(%arg0: i32, %arg1: i32) -> (i32, i32, i32) {
    %c0_i32 = arith.constant 0 : i32
    %c0_i32_0 = arith.constant 0 : i32
    return %arg0, %arg1, %c0_i32 : i32, i32, i32
  }
  func.func @transform_1(%arg0: i32, %arg1: i32) -> (i32, i32) {
    %c0_i32 = arith.constant 0 : i32
    %c0_i32_0 = arith.constant 0 : i32
    %c0_i32_1 = arith.constant 0 : i32
    return %c0_i32, %c0_i32_0 : i32, i32
  }
  func.func @transform_2(%arg0: i32, %arg1: i32) -> (i32, i32) {
    %c0_i32 = arith.constant 0 : i32
    %c0_i32_0 = arith.constant 0 : i32
    %c0_i32_1 = arith.constant 0 : i32
    return %c0_i32, %c0_i32_0 : i32, i32
  }
  func.func @transform_3(%arg0: i32, %arg1: i32) -> (i32, i32, i32) {
    %c0_i32 = arith.constant 0 : i32
    %c0_i32_0 = arith.constant 0 : i32
    return %arg0, %c0_i32, %arg1 : i32, i32, i32
  }
}

</mosaic_0001>

<llo_original>
// kernel: tpu_custom_call.1
$region0: #{tpu_custom_call.1}
  #allocation0 [shape = 'u32[]', space=smem, size = 0x4, offset = 0x4, fixed_abs, tag = 'smem constant byte address 0x4 - core index']
  #allocation1 [shape = 'u32[144,128]{1,0:T(1,128)}', space=vmem, size = 0x12000, scoped, tag = 'internal scratch']
  %s0 = inlined_call_operand.vmem [shape: f32[2,64,32], index: 0, kind: input, shape index: {}]
  %s1 = inlined_call_operand.vmem [shape: f32[64,32], index: 1, kind: input, shape index: {}]
  %s2 = inlined_call_operand.vmem [shape: f32[64,1], index: 2, kind: input, shape index: {}]
  %s3 = inlined_call_operand.hbm [shape: f32[2,64,64], index: 3, kind: output, shape index: {}]
  %s4 = sld [smem:[#allocation0]]
  $region45: #{tpu_custom_call.1} parent=0
    _
  %s6 = ssub.s32 1, %s4
  %s7 = scalar_select 0, %s6, %s4
  $region1: #{tpu_custom_call.1} parent=0
    #allocation2 [shape = 'u8[65536]{0}', space=vmem, size = 0x10000, scoped, tag = 'output window, operand 0']
    #allocation3 [shape = 's32[2]{0}', space=sflag, size = 0x8, scoped, tag = 'scoped memory for tpu_custom_call.1']
    %8 = vsyncpa [#allocation3], 0
    %s9 = scalar_lea.sflag [#allocation3], 1
    %10 = vsyncpa %s9, 0
    loop: start=0, step=1, limit=4
    $region2: #{tpu_custom_call.1} parent=1 // loop_pre_header
      _
    $region3: #{tpu_custom_call.1} parent=1 // loop_header
      %s12 = sphi 0, %s16
      %p13 = scmp.ge.s32.totalorder %s12, 4
      %s19 = sphi 0, %s31
      %s20 = sphi 0, %s27
      %s21 = sphi 0, %s19
      %s22 = sphi 0, %s20
      %s23 = sphi 0, %s21
      %s24 = sphi 0, %s22
      %s36 = sphi 0, %s38
      %s39 = sphi 0, %s36
      %s40 = sphi 0, %s39
      %s56 = sphi 0, %s40
      %s60 = sphi 0, %s60
      %s62 = sphi 0, %s60
      %s63 = sphi 0, %s62
      %s77 = sphi 0, %s63
      %s81 = sphi 0, %s81
      %s83 = sphi 0, %s81
      %s84 = sphi 0, %s83
      %s98 = sphi 0, %s84
      %s106 = sphi 0, %s108
      %s109 = sphi 0, %s106
      %s110 = sphi 0, %s109
      %s126 = sphi 0, %s110
    $region4: #{tpu_custom_call.1} parent=1 // loop_header_branch
      %15 = sbr.rel (%p13) target = $region8
    $region5: #{tpu_custom_call.1} parent=1 // loop_body
      %s17 = ssub.s32 %s12, 1
      %s18 = ssub.s32 %s12, 2
      %s25 = sadd.s32 1, %s20
      %p26 = scmp.ge.s32.totalorder %s25, 1
      %s27 = scalar_select %p26, 0, %s25
      %s28 = sadd.s32 1, %s19
      %s29 = scalar_select %p26, %s28, %s19
      %p30 = scmp.ge.s32.totalorder %s29, 2
      %s31 = scalar_select %p30, 0, %s29
      %s32 = ssub.s32 %s19, %s31
      %s33 = ssub.s32 %s20, %s27
      %s34 = sor.u32 %s32, %s33
      %p35 = scmp.eq.s32.totalorder %s34, 0
      %s37 = sadd.s32 %s36, 1
      %s38 = scalar_select %p35, %s36, %s37
      %p41 = pneg %p35
      %p42 = scmp.eq.s32.totalorder %s12, 1
      %p43 = por %p41, %p42
      %p44 = scmp.ne.s32.totalorder %s36, %s39
      %p45 = scmp.eq.s32.totalorder %s12, 0
      %p46 = por %p44, %p45
      %p47 = scmp.ne.s32.totalorder %s36, %s39
      %p48 = scmp.eq.s32.totalorder %s17, 1
      %p49 = por %p47, %p48
      %p50 = scmp.ne.s32.totalorder %s39, %s40
      %p51 = scmp.eq.s32.totalorder %s17, 0
      %p52 = por %p50, %p51
      %p53 = scmp.ne.s32.totalorder %s39, %s40
      %p54 = scmp.eq.s32.totalorder %s18, 1
      %p55 = por %p53, %p54
      %p57 = scmp.ne.s32.totalorder %s40, %s56
      %p58 = scmp.eq.s32.totalorder %s18, 0
      %p59 = por %p57, %p58
      %s61 = sadd.s32 %s60, 1
      %p64 = scmp.eq.s32.totalorder %s12, 1
      %p65 = scmp.ne.s32.totalorder %s60, %s62
      %p66 = scmp.eq.s32.totalorder %s12, 0
      %p67 = por %p65, %p66
      %p68 = scmp.ne.s32.totalorder %s60, %s62
      %p69 = scmp.eq.s32.totalorder %s17, 1
      %p70 = por %p68, %p69
      %p71 = scmp.ne.s32.totalorder %s62, %s63
      %p72 = scmp.eq.s32.totalorder %s17, 0
      %p73 = por %p71, %p72
      %p74 = scmp.ne.s32.totalorder %s62, %s63
      %p75 = scmp.eq.s32.totalorder %s18, 1
      %p76 = por %p74, %p75
      %p78 = scmp.ne.s32.totalorder %s63, %s77
      %p79 = scmp.eq.s32.totalorder %s18, 0
      %p80 = por %p78, %p79
      %s82 = sadd.s32 %s81, 1
      %p85 = scmp.eq.s32.totalorder %s12, 1
      %p86 = scmp.ne.s32.totalorder %s81, %s83
      %p87 = scmp.eq.s32.totalorder %s12, 0
      %p88 = por %p86, %p87
      %p89 = scmp.ne.s32.totalorder %s81, %s83
      %p90 = scmp.eq.s32.totalorder %s17, 1
      %p91 = por %p89, %p90
      %p92 = scmp.ne.s32.totalorder %s83, %s84
      %p93 = scmp.eq.s32.totalorder %s17, 0
      %p94 = por %p92, %p93
      %p95 = scmp.ne.s32.totalorder %s83, %s84
      %p96 = scmp.eq.s32.totalorder %s18, 1
      %p97 = por %p95, %p96
      %p99 = scmp.ne.s32.totalorder %s84, %s98
      %p100 = scmp.eq.s32.totalorder %s18, 0
      %p101 = por %p99, %p100
      %s102 = ssub.s32 %s19, %s31
      %s103 = ssub.s32 %s20, %s27
      %s104 = sor.u32 %s102, %s103
      %p105 = scmp.eq.s32.totalorder %s104, 0
      %s107 = sadd.s32 %s106, 1
      %s108 = scalar_select %p105, %s106, %s107
      %p111 = pneg %p105
      %p112 = scmp.eq.s32.totalorder %s12, 1
      %p113 = por %p111, %p112
      %p114 = scmp.ne.s32.totalorder %s106, %s109
      %p115 = scmp.eq.s32.totalorder %s12, 0
      %p116 = por %p114, %p115
      %p117 = scmp.ne.s32.totalorder %s106, %s109
      %p118 = scmp.eq.s32.totalorder %s17, 1
      %p119 = por %p117, %p118
      %p120 = scmp.ne.s32.totalorder %s109, %s110
      %p121 = scmp.eq.s32.totalorder %s17, 0
      %p122 = por %p120, %p121
      %p123 = scmp.ne.s32.totalorder %s109, %s110
      %p124 = scmp.eq.s32.totalorder %s18, 1
      %p125 = por %p123, %p124
      %p127 = scmp.ne.s32.totalorder %s110, %s126
      %p128 = scmp.eq.s32.totalorder %s18, 0
      %p129 = por %p127, %p128
      %p130 = scmp.le.s32.totalorder 1, %s12
      %p131 = scmp.lt.s32.totalorder %s12, 3
      %p132 = pnand %p130, %p131
      %p133 = pneg %p132
      // Predicated region
      $region9: #{tpu_custom_call.1} parent=5 // pred_check
        _
      $region10: #{tpu_custom_call.1} parent=5 // pred_check_branch
        %135 = sbr.rel (%p132) target = $region12
      $region11: #{tpu_custom_call.1} parent=5 // pred_region
        %s136 = ssub.s32 %s12, 1
        // Predicated region
        $region13: #{tpu_custom_call.1} parent=11 // pred_check
          %p137 = pneg %p73
        $region14: #{tpu_custom_call.1} parent=11 // pred_check_branch
          %139 = sbr.rel (%p137) target = $region16
        $region15: #{tpu_custom_call.1} parent=11 // pred_region
          _
        $region16: #{tpu_custom_call.1} parent=11 // pred_fallthru
          _
        // Predicated region
        $region17: #{tpu_custom_call.1} parent=11 // pred_check
          %p140 = pneg %p94
        $region18: #{tpu_custom_call.1} parent=11 // pred_check_branch
          %142 = sbr.rel (%p140) target = $region20
        $region19: #{tpu_custom_call.1} parent=11 // pred_region
          _
        $region20: #{tpu_custom_call.1} parent=11 // pred_fallthru
          _
      $region12: #{tpu_custom_call.1} parent=5 // pred_fallthru
        _
      %p143 = scmp.lt.s32.totalorder %s12, 2
      // Predicated region
      $region21: #{tpu_custom_call.1} parent=5 // pred_check
        %p144 = pneg %p143
      $region22: #{tpu_custom_call.1} parent=5 // pred_check_branch
        %146 = sbr.rel (%p144) target = $region24
      $region23: #{tpu_custom_call.1} parent=5 // pred_region
        // Predicated region
        $region25: #{tpu_custom_call.1} parent=23 // pred_check
          %p147 = pneg %p46
        $region26: #{tpu_custom_call.1} parent=23 // pred_check_branch
          %149 = sbr.rel (%p147) target = $region28
        $region27: #{tpu_custom_call.1} parent=23 // pred_region
          %s150 = smul.u32 8, %s20
          %p151 = scmp.lt.s32.totalorder %s19, 1
          %s152 = scalar_select %p151, %s19, 1
          %p153 = scmp.lt.s32.totalorder %s150, 7
          %s154 = scalar_select %p153, %s150, 7
          %s155 = smul.addr %s152, 8
          %s156 = sadd.s32 %s154, %s155
          %s157 = smul.addr %s156, 8
          %s158 = scalar_lea.vmem %s0, %s157
          %s159 = smul.u32 8, %s20
        $region28: #{tpu_custom_call.1} parent=23 // pred_fallthru
          _
      $region24: #{tpu_custom_call.1} parent=5 // pred_fallthru
        _
      %p160 = scmp.le.s32.totalorder 1, %s12
      %p161 = scmp.lt.s32.totalorder %s12, 3
      %p162 = pnand %p160, %p161
      %p163 = pneg %p162
      // Predicated region
      $region29: #{tpu_custom_call.1} parent=5 // pred_check
        _
      $region30: #{tpu_custom_call.1} parent=5 // pred_check_branch
        %165 = sbr.rel (%p162) target = $region32
      $region31: #{tpu_custom_call.1} parent=5 // pred_region
        %s166 = ssub.s32 %s12, 1
        %s167 = smul.u32 8, %s22
        %p168 = scmp.lt.s32.totalorder %s21, 1
        %s169 = scalar_select %p168, %s21, 1
        %p170 = scmp.lt.s32.totalorder %s167, 7
        %s171 = scalar_select %p170, %s167, 7
        %s172 = smul.addr %s169, 8
        %s173 = sadd.s32 %s171, %s172
        %s174 = smul.addr %s173, 8
        %s175 = scalar_lea.vmem %s0, %s174
        %p176 = pneg %p52
        %p177 = pneg %p49
        %p178 = pneg %p73
        %p179 = pneg %p70
        %p180 = pneg %p94
        %p181 = pneg %p91
        %p182 = pneg %p122
        %p183 = pneg %p119
        %s184 = sand.u32 %s109, 1
        %s185 = scalar_lea.sflag [#allocation3], %s184
        %s186 = sand.u32 %s109, 1
        %s187 = smul.addr %s186, 64
        %s188 = scalar_lea.vmem [#allocation2], %s187
        %s189 = smul.u32 8, %s22
        %p190 = scmp.lt.s32.totalorder %s21, 1
        %s191 = scalar_select %p190, %s21, 1
        %p192 = scmp.lt.s32.totalorder %s189, 7
        %s193 = scalar_select %p192, %s189, 7
        %s194 = smul.addr %s191, 8
        %s195 = sadd.s32 %s193, %s194
        %s196 = smul.addr %s195, 8
        %s197 = scalar_lea.vmem %s0, %s196
        %s198 = smul.u32 8, %s22
        %v199 = vld [vmem:[%s1] sm:$0xff]
        %v200 = vld [vmem:[%s1 + $0x8] sm:$0xff]
        %v201 = vld [vmem:[%s1 + $0x10] sm:$0xff]
        %v202 = vld [vmem:[%s1 + $0x18] sm:$0xff]
        %v203 = vld [vmem:[%s1 + $0x20] sm:$0xff]
        %v204 = vld [vmem:[%s1 + $0x28] sm:$0xff]
        %v205 = vld [vmem:[%s1 + $0x30] sm:$0xff]
        %v206 = vld [vmem:[%s1 + $0x38] sm:$0xff]
        %v207 = vld [vmem:[%s197] sm:$0xff]
        %v208 = vld [vmem:[%s197 + $0x8] sm:$0xff]
        %v209 = vld [vmem:[%s197 + $0x10] sm:$0xff]
        %v210 = vld [vmem:[%s197 + $0x18] sm:$0xff]
        %v211 = vld [vmem:[%s197 + $0x20] sm:$0xff]
        %v212 = vld [vmem:[%s197 + $0x28] sm:$0xff]
        %v213 = vld [vmem:[%s197 + $0x30] sm:$0xff]
        %v214 = vld [vmem:[%s197 + $0x38] sm:$0xff]
        %v215 = vld [vmem:[%s2] sm:$0xff]
        %v216 = vld [vmem:[%s2 + $0x8] sm:$0xff]
        %v217 = vld [vmem:[%s2 + $0x10] sm:$0xff]
        %v218 = vld [vmem:[%s2 + $0x18] sm:$0xff]
        %v219 = vld [vmem:[%s2 + $0x20] sm:$0xff]
        %v220 = vld [vmem:[%s2 + $0x28] sm:$0xff]
        %v221 = vld [vmem:[%s2 + $0x30] sm:$0xff]
        %v222 = vld [vmem:[%s2 + $0x38] sm:$0xff]
        %224 = vset.pattern.permute.xlu0 0
        %225 = vperm.xlu0 %224, %v215
        %v226 = vpop.permute.xlu0 %225
        %229 = vset.pattern.permute.xlu0 0
        %230 = vperm.xlu0 %229, %v216
        %v231 = vpop.permute.xlu0 %230
        %234 = vset.pattern.permute.xlu0 0
        %235 = vperm.xlu0 %234, %v217
        %v236 = vpop.permute.xlu0 %235
        %239 = vset.pattern.permute.xlu0 0
        %240 = vperm.xlu0 %239, %v218
        %v241 = vpop.permute.xlu0 %240
        %244 = vset.pattern.permute.xlu0 0
        %245 = vperm.xlu0 %244, %v219
        %v246 = vpop.permute.xlu0 %245
        %249 = vset.pattern.permute.xlu0 0
        %250 = vperm.xlu0 %249, %v220
        %v251 = vpop.permute.xlu0 %250
        %254 = vset.pattern.permute.xlu0 0
        %255 = vperm.xlu0 %254, %v221
        %v256 = vpop.permute.xlu0 %255
        %259 = vset.pattern.permute.xlu0 0
        %260 = vperm.xlu0 %259, %v222
        %v261 = vpop.permute.xlu0 %260
        %vm263 = vcmask 261120
        %v265 = vsel %vm263, %v199, 0
        %v268 = vsel %vm263, %v200, 0
        %v271 = vsel %vm263, %v201, 0
        %v274 = vsel %vm263, %v202, 0
        %v277 = vsel %vm263, %v203, 0
        %v280 = vsel %vm263, %v204, 0
        %v283 = vsel %vm263, %v205, 0
        %v286 = vsel %vm263, %v206, 0
        %v289 = vsel %vm263, %v207, 0
        %v292 = vsel %vm263, %v208, 0
        %v295 = vsel %vm263, %v209, 0
        %v298 = vsel %vm263, %v210, 0
        %v301 = vsel %vm263, %v211, 0
        %v304 = vsel %vm263, %v212, 0
        %v307 = vsel %vm263, %v213, 0
        %v310 = vsel %vm263, %v214, 0
        %312 = vmatprep.subr.mxu0 0.0
        %313 = vmatpush1.xpose.msra.mxu0 0.0
        %314 = vmatprep.subr.mxu0 0.0
        %315 = vmatpush1.xpose.msra.mxu0 0.0
        %316 = vmatprep.subr.mxu0 0.0
        %317 = vmatpush1.xpose.msra.mxu0 0.0
        %318 = vmatprep.subr.mxu0 0.0
        %319 = vmatpush1.xpose.msra.mxu0 0.0
        %320 = vmatprep.subr.mxu0 0.0
        %321 = vmatpush1.xpose.msra.mxu0 0.0
        %322 = vmatprep.subr.mxu0 0.0
        %323 = vmatpush1.xpose.msra.mxu0 0.0
        %324 = vmatprep.subr.mxu0 0.0
        %325 = vmatpush1.xpose.msra.mxu0 0.0
        %326 = vmatprep.subr.mxu0 0.0
        %327 = vmatpush1.xpose.msra.mxu0 0.0
        %328 = vmatprep.subr.mxu0 0.0
        %329 = vmatpush1.xpose.msra.mxu0 %v310
        %330 = vmatprep.subr.mxu0 0.0
        %331 = vmatpush1.xpose.msra.mxu0 %v307
        %332 = vmatprep.subr.mxu0 0.0
        %333 = vmatpush1.xpose.msra.mxu0 %v304
        %334 = vmatprep.subr.mxu0 0.0
        %335 = vmatpush1.xpose.msra.mxu0 %v301
        %336 = vmatprep.subr.mxu0 0.0
        %337 = vmatpush1.xpose.msra.mxu0 %v298
        %338 = vmatprep.subr.mxu0 0.0
        %339 = vmatpush1.xpose.msra.mxu0 %v295
        %340 = vmatprep.subr.mxu0 0.0
        %341 = vmatpush1.xpose.msra.mxu0 %v292
        %342 = vmatprep.subr.mxu0 0.0
        %343 = vmatpush1.xpose.msra.mxu0 %v289
        %344 = vmatprep.subr.mxu0 0.0
        %345 = vmatpush2.xpose.msra.mxu0 0.0
        %346 = vmatprep.subr.mxu0 0.0
        %347 = vmatpush2.xpose.msra.mxu0 0.0
        %348 = vmatprep.subr.mxu0 0.0
        %349 = vmatpush2.xpose.msra.mxu0 0.0
        %350 = vmatprep.subr.mxu0 0.0
        %351 = vmatpush2.xpose.msra.mxu0 0.0
        %352 = vmatprep.subr.mxu0 0.0
        %353 = vmatpush2.xpose.msra.mxu0 0.0
        %354 = vmatprep.subr.mxu0 0.0
        %355 = vmatpush2.xpose.msra.mxu0 0.0
        %356 = vmatprep.subr.mxu0 0.0
        %357 = vmatpush2.xpose.msra.mxu0 0.0
        %358 = vmatprep.subr.mxu0 0.0
        %359 = vmatpush2.xpose.msra.mxu0 0.0
        %360 = vmatprep.subr.mxu0 0.0
        %361 = vmatpush2.xpose.msra.mxu0 0.0
        %362 = vmatprep.subr.mxu0 0.0
        %363 = vmatpush2.xpose.msra.mxu0 0.0
        %364 = vmatprep.subr.mxu0 0.0
        %365 = vmatpush2.xpose.msra.mxu0 0.0
        %366 = vmatprep.subr.mxu0 0.0
        %367 = vmatpush2.xpose.msra.mxu0 0.0
        %368 = vmatprep.subr.mxu0 0.0
        %369 = vmatpush2.xpose.msra.mxu0 0.0
        %370 = vmatprep.subr.mxu0 0.0
        %371 = vmatpush2.xpose.msra.mxu0 0.0
        %372 = vmatprep.subr.mxu0 0.0
        %373 = vmatpush2.xpose.msra.mxu0 0.0
        %374 = vmatprep.subr.mxu0 0.0
        %375 = vmatpush2.xpose.msra.mxu0 0.0
        %376 = vmatprep.mubr.f32.mxu0 0.0
        %377 = vmatmul.mubr.f32.gmra.mxu0 %v265
        %v378 = vpop.f32.mrf.mxu0
        %v379 = vadd.f32 %v226, %v378
        %v380 = vpop.f32.mrf.mxu0
        %381 = vmatprep.mubr.f32.mxu0 0.0
        %382 = vmatmul.mubr.f32.gmra.mxu0 %v268
        %v383 = vpop.f32.mrf.mxu0
        %v384 = vadd.f32 %v231, %v383
        %v385 = vpop.f32.mrf.mxu0
        %386 = vmatprep.mubr.f32.mxu0 0.0
        %387 = vmatmul.mubr.f32.gmra.mxu0 %v271
        %v388 = vpop.f32.mrf.mxu0
        %v389 = vadd.f32 %v236, %v388
        %v390 = vpop.f32.mrf.mxu0
        %391 = vmatprep.mubr.f32.mxu0 0.0
        %392 = vmatmul.mubr.f32.gmra.mxu0 %v274
        %v393 = vpop.f32.mrf.mxu0
        %v394 = vadd.f32 %v241, %v393
        %v395 = vpop.f32.mrf.mxu0
        %396 = vmatprep.mubr.f32.mxu0 0.0
        %397 = vmatmul.mubr.f32.gmra.mxu0 %v277
        %v398 = vpop.f32.mrf.mxu0
        %v399 = vadd.f32 %v246, %v398
        %v400 = vpop.f32.mrf.mxu0
        %401 = vmatprep.mubr.f32.mxu0 0.0
        %402 = vmatmul.mubr.f32.gmra.mxu0 %v280
        %v403 = vpop.f32.mrf.mxu0
        %v404 = vadd.f32 %v251, %v403
        %v405 = vpop.f32.mrf.mxu0
        %406 = vmatprep.mubr.f32.mxu0 0.0
        %407 = vmatmul.mubr.f32.gmra.mxu0 %v283
        %v408 = vpop.f32.mrf.mxu0
        %v409 = vadd.f32 %v256, %v408
        %v410 = vpop.f32.mrf.mxu0
        %411 = vmatprep.mubr.f32.mxu0 0.0
        %412 = vmatmul.mubr.f32.gmra.mxu0 %v286
        %v413 = vpop.f32.mrf.mxu0
        %v414 = vadd.f32 %v261, %v413
        %v415 = vpop.f32.mrf.mxu0
        %416 = vdwg.mxu0
        %vm417 = vcmask 523264
        %418 = vst.msk [vmem:[%s188] sm:$0xff] %vm417, %v379
        %419 = vst.msk [vmem:[%s188 + $0x8] sm:$0xff] %vm417, %v384
        %420 = vst.msk [vmem:[%s188 + $0x10] sm:$0xff] %vm417, %v389
        %421 = vst.msk [vmem:[%s188 + $0x18] sm:$0xff] %vm417, %v394
        %422 = vst.msk [vmem:[%s188 + $0x20] sm:$0xff] %vm417, %v399
        %423 = vst.msk [vmem:[%s188 + $0x28] sm:$0xff] %vm417, %v404
        %424 = vst.msk [vmem:[%s188 + $0x30] sm:$0xff] %vm417, %v409
        %425 = vst.msk [vmem:[%s188 + $0x38] sm:$0xff] %vm417, %v414
        %s426 = sand.u32 %s109, 1
        %s427 = scalar_lea.sflag [#allocation3], %s426
        %s428 = sand.u32 %s109, 1
        %s429 = smul.addr %s428, 64
        %s430 = scalar_lea.vmem [#allocation2], %s429
        // Predicated region
        $region33: #{tpu_custom_call.1} parent=31 // pred_check
          %p431 = pneg %p119
        $region34: #{tpu_custom_call.1} parent=31 // pred_check_branch
          %433 = sbr.rel (%p431) target = $region36
        $region35: #{tpu_custom_call.1} parent=31 // pred_region
          %s435 = ssub.s32 1024, 1024
          %436 = vsyncadd %s427, %s435
          %s437 = smul.addr %s21, 8
          %s438 = sadd.s32 %s22, %s437
          %s439 = smul.addr %s438, 128
          %s440 = scalar_lea.hbm %s3, %s439
          %s441 = sshll.u32 %s430, 4
          %s442 = int_to_ptr.vmem [resolvable:$true] %s441
          %447 = dma.vmem_to_hbm [thread:$0]  %s442, 1024, %s440, %s427, 128, 128, 8
        $region36: #{tpu_custom_call.1} parent=31 // pred_fallthru
          _
      $region32: #{tpu_custom_call.1} parent=5 // pred_fallthru
        _
      %p448 = scmp.le.s32.totalorder 2, %s12
      // Predicated region
      $region37: #{tpu_custom_call.1} parent=5 // pred_check
        %p449 = pneg %p448
      $region38: #{tpu_custom_call.1} parent=5 // pred_check_branch
        %451 = sbr.rel (%p449) target = $region40
      $region39: #{tpu_custom_call.1} parent=5 // pred_region
        %s452 = ssub.s32 %s12, 2
        // Predicated region
        $region41: #{tpu_custom_call.1} parent=39 // pred_check
          %p453 = pneg %p125
        $region42: #{tpu_custom_call.1} parent=39 // pred_check_branch
          %455 = sbr.rel (%p453) target = $region44
        $region43: #{tpu_custom_call.1} parent=39 // pred_region
          %s456 = sand.u32 %s110, 1
          %s457 = scalar_lea.sflag [#allocation3], %s456
          %s458 = sand.u32 %s110, 1
          %s459 = smul.addr %s458, 64
          %s460 = scalar_lea.vmem [#allocation2], %s459
          %461 = dma.done %s457, 1024
        $region44: #{tpu_custom_call.1} parent=39 // pred_fallthru
          _
      $region40: #{tpu_custom_call.1} parent=5 // pred_fallthru
        _
    $region6: #{tpu_custom_call.1} parent=1 // loop_footer
      %s16 = sadd.s32 1, %s12
    $region7: #{tpu_custom_call.1} parent=1 // loop_footer_branch
      %11 = sbr.rel target = $region3
    $region8: #{tpu_custom_call.1} parent=1 // loop_exit
      _
    %462 = vsyncpa [#allocation3], 1
    %s463 = scalar_lea.sflag [#allocation3], 1
    %464 = vsyncpa %s463, 1

</llo_original>
